<compile_context>
chip_gen: v7x
topology: tpu7x:2x2x1
jax: 0.10.0
libtpu: 0.0.40
codegen_flags: <defaults>
</compile_context>

<pallas_src>
import jax
import jax.numpy as jnp
from jax.experimental import pallas as pl
from jax.experimental.pallas import tpu as pltpu


def _copy_kernel(x_ref, o_ref):
    # Prefix path: the BlockSpec already selected only the kept columns.
    o_ref[...] = x_ref[...]


def _make_slice_kernel(keep):
    # Fallback path: full row loaded, static slice of the VMEM block.
    def kernel(x_ref, o_ref):
        o_ref[...] = x_ref[:, :keep]

    return kernel


def chomp_t(x, t, *, vmem_budget_bytes=8 * 1024 * 1024):
    """Equivalent of PyTorch Chomp_T(t): x[:, :, :-t, :] for x of shape (B,C,T,F)."""
    B, C, T, F = x.shape
    assert 0 < t < T, "Chomp_T requires 0 < t < T"
    Tp = T - t

    keep = Tp * F            # kept columns per flattened row
    full = T * F             # full columns per flattened row
    N = B * C                # number of flattened rows

    # Lane-dense 2-D view; free row-major reshape.
    x2 = x.reshape(N, full)

    itemsize = jnp.dtype(x.dtype).itemsize

    # Prefix trick is only legal when the (8,128) rule holds for the input
    # block's last dim (it no longer equals the full array dim).
    prefix_ok = (keep % 128) == 0
    in_lane = keep if prefix_ok else full
    per_row_bytes = (in_lane + keep) * itemsize  # in-block + out-block per row

    # Rows per block: biggest multiple of 8 whose double-buffered footprint
    # fits the budget, capped at N (block == full dim is always legal).
    rows = int(vmem_budget_bytes // max(2 * per_row_bytes, 1))
    if rows >= N:
        rows_blk = N
    else:
        rows_blk = max(8, (rows // 8) * 8)
        if rows_blk >= N:
            rows_blk = N

    # If everything fits in one block but there is plenty of data, split into
    # exactly 2 steps so both v7x TensorCores get work (negligible cost on
    # single-TC v5e/v6e).  Never drop per-step blocks below ~1 MiB.
    MIN_SPLIT_BYTES = 1 << 20
    if rows_blk == N and N >= 16:
        half = ((N + 1) // 2 + 7) // 8 * 8
        if half < N and half * per_row_bytes >= MIN_SPLIT_BYTES:
            rows_blk = half

    grid = (pl.cdiv(N, rows_blk),)

    # Explicit VMEM limit only when the double-buffered footprint could exceed
    # the smallest default scoped VMEM (16 MiB on v5e); add ~25% headroom.
    footprint = 2 * rows_blk * per_row_bytes
    compiler_kwargs = dict(dimension_semantics=("parallel",))
    if footprint * 5 // 4 > (12 << 20):
        compiler_kwargs["vmem_limit_bytes"] = int(footprint * 5 // 4)

    if prefix_ok:
        kernel = _copy_kernel
        in_spec = pl.BlockSpec((rows_blk, keep), lambda r: (r, 0))
    else:
        kernel = _make_slice_kernel(keep)
        in_spec = pl.BlockSpec((rows_blk, full), lambda r: (r, 0))

    out2 = pl.pallas_call(
        kernel,
        out_shape=jax.ShapeDtypeStruct((N, keep), x.dtype),
        grid=grid,
        in_specs=[in_spec],
        out_specs=pl.BlockSpec((rows_blk, keep), lambda r: (r, 0)),
        compiler_params=pltpu.CompilerParams(**compiler_kwargs),
    )(x2)

    return out2.reshape(B, C, Tp, F)


def _reference(x, t):
    return x[:, :, : x.shape[2] - t, :]


def _check(x, t, **kwargs):
    out = chomp_t(x, t, **kwargs)
    jax.block_until_ready(out)
    ref = _reference(x, t)
    assert out.shape == ref.shape, (out.shape, ref.shape)
    assert out.dtype == x.dtype
    assert jnp.array_equal(out, ref), "mismatch vs reference"


if __name__ == "__main__":
    key = jax.random.PRNGKey(0)

    # Primary case (fallback path: (T-t)*F = 224 not 128-aligned).
    B, C, T, F = 2, 4, 16, 16
    x = jax.random.normal(key, (B, C, T, F), dtype=jnp.float32)
    _check(x, 2)

    # Prefix fast path: (T-t)*F = 8*16 = 128 -> tail never read from HBM.
    _check(x, 8)

    # Multi-step grid with a partial (masked) last row block: N = 15 rows,
    # tiny budget forces rows_blk = 8 -> grid of 2 steps.
    key2 = jax.random.PRNGKey(0)
    x2 = jax.random.normal(key2, (3, 5, 16, 16), dtype=jnp.float32)
    _check(x2, 2, vmem_budget_bytes=16 * 1024)

    # Prefix path + multi-step + partial block: (T-t)*F = 16*16 = 256.
    x3 = jax.random.normal(key2, (3, 5, 24, 16), dtype=jnp.float32)
    _check(x3, 8, vmem_budget_bytes=16 * 1024)

    print("KERNEL_OK")
</pallas_src>

<mosaic_0001>
module attributes {stable_mosaic.version = 11 : i64} {
  func.func @kernel(%arg0: i32, %arg1: memref<8x256xf32, #tpu.memory_space<vmem>>, %arg2: memref<8x224xf32, #tpu.memory_space<vmem>>) attributes {dimension_semantics = [#tpu.dimension_semantics<parallel>], iteration_bounds = array<i64: 1>, scalar_prefetch = 0 : i64, scratch_operands = 0 : i64, tpu.core_type = #tpu.core_type<tc>, window_params = [{transform_indices = @transform_0, window_bounds = array<i64: 8, 256>}, {transform_indices = @transform_1, window_bounds = array<i64: 8, 224>}]} {
    %c0 = arith.constant 0 : index
    %c0_0 = arith.constant 0 : index
    %0 = vector.load %arg1[%c0, %c0_0] : memref<8x256xf32, #tpu.memory_space<vmem>>, vector<8x224xf32>
    %c0_1 = arith.constant 0 : index
    %c0_2 = arith.constant 0 : index
    %1 = vector.load %arg2[%c0_1, %c0_2] : memref<8x224xf32, #tpu.memory_space<vmem>>, vector<8x224xf32>
    tpu.vector_store %arg2[%c0_1, %c0_2], %0 {strides = array<i32>} : memref<8x224xf32, #tpu.memory_space<vmem>>, vector<8x224xf32>,
    return
  }
  func.func @transform_0(%arg0: i32) -> (i32, i32) {
    %c0_i32 = arith.constant 0 : i32
    %c0_i32_0 = arith.constant 0 : i32
    return %arg0, %c0_i32 : i32, i32
  }
  func.func @transform_1(%arg0: i32) -> (i32, i32) {
    %c0_i32 = arith.constant 0 : i32
    %c0_i32_0 = arith.constant 0 : i32
    return %arg0, %c0_i32 : i32, i32
  }
}

</mosaic_0001>

<llo_original>
// kernel: tpu_custom_call.1
$region0: #{tpu_custom_call.1}
  #allocation0 [shape = 'u32[]', space=smem, size = 0x4, offset = 0x4, fixed_abs, tag = 'smem constant byte address 0x4 - core index']
  #allocation1 [shape = 'u32[144,128]{1,0:T(1,128)}', space=vmem, size = 0x12000, scoped, tag = 'internal scratch']
  %s0 = inlined_call_operand.hbm [shape: f32[8,256], index: 0, kind: input, shape index: {}]
  %s1 = inlined_call_operand.hbm [shape: f32[8,224], index: 1, kind: output, shape index: {}]
  %s2 = sld [smem:[#allocation0]]
  $region18: #{tpu_custom_call.1} parent=0
    _
  %s4 = ssub.s32 1, %s2
  %s5 = scalar_select 0, %s4, %s2
  $region1: #{tpu_custom_call.1} parent=0
    #allocation2 [shape = 'u8[8192]{0}', space=vmem, size = 0x2000, scoped, tag = 'input window, operand 0, single buffered']
    #allocation3 [shape = 's32[1]{0}', space=sflag, size = 0x4, scoped, tag = 'scoped memory for tpu_custom_call.1']
    #allocation4 [shape = 's32[1]{0}', space=sflag, size = 0x4, scoped, tag = 'scoped memory for tpu_custom_call.1']
    #allocation5 [shape = 'u8[8192]{0}', space=vmem, size = 0x2000, scoped, tag = 'output window, operand 0, single buffered']
    %6 = vsyncpa [#allocation3], 0
    %7 = vsyncpa [#allocation4], 0
    // Predicated region
    $region2: #{tpu_custom_call.1} parent=1 // pred_check
      _
    $region3: #{tpu_custom_call.1} parent=1 // pred_check_branch
      %9 = sbr.rel (0) target = $region5
    $region4: #{tpu_custom_call.1} parent=1 // pred_region
      %s11 = ssub.s32 256, 256
      %12 = vsyncadd [#allocation3], %s11
      %s14 = sshll.u32 [#allocation2], 4
      %s15 = int_to_ptr.vmem [resolvable:$true] %s14
      %17 = dma.hbm_to_vmem [thread:$0]  %s0, 256, %s15, [#allocation3]
    $region5: #{tpu_custom_call.1} parent=1 // pred_fallthru
      _
    // Predicated region
    $region6: #{tpu_custom_call.1} parent=1 // pred_check
      _
    $region7: #{tpu_custom_call.1} parent=1 // pred_check_branch
      %19 = sbr.rel (0) target = $region9
    $region8: #{tpu_custom_call.1} parent=1 // pred_region
      %20 = dma.done [#allocation3], 256
    $region9: #{tpu_custom_call.1} parent=1 // pred_fallthru
      _
    %v21 = vld [vmem:[#allocation2] sm:$0xff]
    %v22 = vld [vmem:[#allocation2 + $0x8] sm:$0xff]
    %23 = vst [vmem:[#allocation5] sm:$0xff] %v21
    %vm24 = vcmask 785408
    %25 = vst.msk [vmem:[#allocation5 + $0x8] sm:$0xff] %vm24, %v22
    // Predicated region
    $region10: #{tpu_custom_call.1} parent=1 // pred_check
      _
    $region11: #{tpu_custom_call.1} parent=1 // pred_check_branch
      %27 = sbr.rel (0) target = $region13
    $region12: #{tpu_custom_call.1} parent=1 // pred_region
      %s29 = ssub.s32 256, 256
      %30 = vsyncadd [#allocation4], %s29
      %s32 = sshll.u32 [#allocation5], 4
      %s33 = int_to_ptr.vmem [resolvable:$true] %s32
      %35 = dma.vmem_to_hbm [thread:$0]  %s33, 256, %s1, [#allocation4]
    $region13: #{tpu_custom_call.1} parent=1 // pred_fallthru
      _
    // Predicated region
    $region14: #{tpu_custom_call.1} parent=1 // pred_check
      _
    $region15: #{tpu_custom_call.1} parent=1 // pred_check_branch
      %37 = sbr.rel (0) target = $region17
    $region16: #{tpu_custom_call.1} parent=1 // pred_region
      %38 = dma.done [#allocation4], 256
    $region17: #{tpu_custom_call.1} parent=1 // pred_fallthru
      _
    %39 = vsyncpa [#allocation3], 1
    %40 = vsyncpa [#allocation4], 1

</llo_original>
